<compile_context>
chip_gen: v6e
topology: v6e:2x2x1
jax: 0.10.0
libtpu: 0.0.40
codegen_flags: <defaults>
</compile_context>

<pallas_src>
import numpy as np
import jax
import jax.numpy as jnp
from jax.experimental import pallas as pl
from jax.experimental.pallas import tpu as pltpu

# ----------------------------- problem sizes ---------------------------------
KS = 80                                # conv kernel size
STRIDE = 15                            # conv stride
B = 8                                  # batch (small test shape)
L = 185                                # input length, (L - KS) % STRIDE == 0
LC = (L - KS) // STRIDE + 1            # post-conv length = 8
CCH = 16                               # conv channels
FLAT = CCH * LC                        # 128
H1 = 256                               # downsample hidden
H2 = 128                               # bottleneck
L_OUT = (LC - 1) * STRIDE + KS         # ConvTranspose1d output length = 185
L_PAD = 256                            # lane-dense padded output width
assert L_OUT == L


# ------------------------------- kernel --------------------------------------
def autoencoder_kernel(x_ref, wc_ref, bc_ref, w1_ref, b1_ref, we_ref, be_ref,
                       wd_ref, bd_ref, wu_ref, bu_ref, wup_ref, bup_ref,
                       out_ref):
    f32 = jnp.float32

    # Conv1d + ReLU as a single Toeplitz matmul: (BM, L) @ (L, FLAT)
    act = jnp.maximum(
        jnp.dot(x_ref[...], wc_ref[...], preferred_element_type=f32)
        + bc_ref[...], 0.0)

    # Linear(128, 256) + ReLU
    d1 = jnp.maximum(
        jnp.dot(act, w1_ref[...], preferred_element_type=f32) + b1_ref[...], 0.0)
    # encoder: Linear(256, 128) + ReLU
    enc = jnp.maximum(
        jnp.dot(d1, we_ref[...], preferred_element_type=f32) + be_ref[...], 0.0)
    # decoder: Linear(128, 256) + ReLU
    dec = jnp.maximum(
        jnp.dot(enc, wd_ref[...], preferred_element_type=f32) + bd_ref[...], 0.0)
    # upsample Linear(256, 128) + ReLU
    z = jnp.maximum(
        jnp.dot(dec, wu_ref[...], preferred_element_type=f32) + bu_ref[...], 0.0)

    # ConvTranspose1d + overlap-add folded into one (FLAT, L_PAD) weight,
    # scalar bias folded into bup.  Output is lane-dense (BM, 256).
    y = jnp.dot(z, wup_ref[...], preferred_element_type=f32) + bup_ref[...]
    out_ref[...] = jax.nn.sigmoid(y)


# ------------------------------ wrapper ---------------------------------------
def make_kernel_params(pt_params):
    """Convert PyTorch-shaped parameters into fused, kernel-friendly layouts."""
    Wc, bc, W1, b1, We, be, Wd, bd, Wu, bu, Wt, bt = [np.asarray(p, np.float32)
                                                      for p in pt_params]

    # Toeplitz conv weight (L, FLAT), PyTorch flatten order (c*LC + t).
    wconv = np.zeros((L, FLAT), np.float32)
    bconv = np.zeros((1, FLAT), np.float32)
    for c in range(CCH):
        for t in range(LC):
            wconv[t * STRIDE: t * STRIDE + KS, c * LC + t] = Wc[c, 0, :]
            bconv[0, c * LC + t] = bc[c]

    w1_k = W1.T                          # (FLAT, H1)
    b1_k = b1.reshape(1, H1)
    we_k = We.T                          # (H1, H2)
    be_k = be.reshape(1, H2)
    wd_k = Wd.T                          # (H2, H1)
    bd_k = bd.reshape(1, H1)
    wu_k = Wu.T                          # (H1, FLAT)
    bu_k = bu.reshape(1, FLAT)

    # Fused ConvTranspose1d + overlap-add weight, zero-padded to lane-dense width.
    wup = np.zeros((FLAT, L_PAD), np.float32)
    for c in range(CCH):
        for t in range(LC):
            wup[c * LC + t, t * STRIDE: t * STRIDE + KS] += Wt[c, 0, :]
    bup = np.zeros((1, L_PAD), np.float32)
    bup[0, :L_OUT] = bt[0]

    arrs = (wconv, bconv, w1_k, b1_k, we_k, be_k, wd_k, bd_k,
            wu_k, bu_k, wup, bup)
    return tuple(jnp.asarray(a) for a in arrs)


@jax.jit
def autoencoder_forward(x_ncl, kparams):
    # x_ncl: (B, 1, L) float32 (PyTorch NCL layout)
    x2d = x_ncl[:, 0, :]                                  # (B, L)
    BM = min(B, 128)                                      # row-block size
    assert B % BM == 0
    grid = (B // BM,)

    in_specs = [pl.BlockSpec((BM, L), lambda i: (i, 0))]  # input rows per block
    # weights / biases: full arrays, same block every grid step (VMEM-resident)
    in_specs += [pl.BlockSpec(p.shape, lambda i: (0, 0)) for p in kparams]
    out_specs = pl.BlockSpec((BM, L_PAD), lambda i: (i, 0))

    out = pl.pallas_call(
        autoencoder_kernel,
        out_shape=jax.ShapeDtypeStruct((B, L_PAD), jnp.float32),
        grid_spec=pltpu.PrefetchScalarGridSpec(
            num_scalar_prefetch=0, grid=grid,
            in_specs=in_specs, out_specs=out_specs),
        compiler_params=pltpu.CompilerParams(
            dimension_semantics=("parallel",)),
    )(x2d, *kparams)
    return out[:, :L_OUT][:, None, :]                     # back to (B, 1, L)


# --------------------------- pure-JAX reference --------------------------------
def reference_forward(x_ncl, pt_params):
    Wc, bc, W1, b1, We, be, Wd, bd, Wu, bu, Wt, bt = pt_params
    x2 = x_ncl[:, 0, :]
    idx = (jnp.arange(LC) * STRIDE)[:, None] + jnp.arange(KS)[None, :]
    cols = x2[:, idx]                                                 # (B, LC, KS)
    y = jnp.einsum('btk,ck->bct', cols, Wc[:, 0, :]) + bc[None, :, None]
    y = jnp.maximum(y, 0.0)
    flat = y.reshape(B, FLAT)                                         # c*LC + t
    d1 = jnp.maximum(flat @ W1.T + b1, 0.0)
    e = jnp.maximum(d1 @ We.T + be, 0.0)
    d = jnp.maximum(e @ Wd.T + bd, 0.0)
    u = jnp.maximum(d @ Wu.T + bu, 0.0)
    zc = u.reshape(B, CCH, LC)
    out = jnp.zeros((B, L_OUT), jnp.float32)
    for t in range(LC):
        seg = jnp.einsum('bc,ck->bk', zc[:, :, t], Wt[:, 0, :])
        out = out.at[:, t * STRIDE: t * STRIDE + KS].add(seg)
    return jax.nn.sigmoid(out + bt[0])[:, None, :]


# ---------------------------------- main ----------------------------------------
if __name__ == "__main__":
    key = jax.random.PRNGKey(0)
    ks = jax.random.split(key, 13)
    s = 0.05
    # PyTorch-shaped parameters (deterministic synthetic init)
    Wc = jax.random.normal(ks[0], (CCH, 1, KS), jnp.float32) * s       # Conv1d
    bc = jax.random.normal(ks[1], (CCH,), jnp.float32) * s
    W1 = jax.random.normal(ks[2], (H1, FLAT), jnp.float32) * s         # Linear(128,256)
    b1 = jax.random.normal(ks[3], (H1,), jnp.float32) * s
    We = jax.random.normal(ks[4], (H2, H1), jnp.float32) * s           # Linear(256,128)
    be = jax.random.normal(ks[5], (H2,), jnp.float32) * s
    Wd = jax.random.normal(ks[6], (H1, H2), jnp.float32) * s           # Linear(128,256)
    bd = jax.random.normal(ks[7], (H1,), jnp.float32) * s
    Wu = jax.random.normal(ks[8], (FLAT, H1), jnp.float32) * s         # Linear(256,128)
    bu = jax.random.normal(ks[9], (FLAT,), jnp.float32) * s
    Wt = jax.random.normal(ks[10], (CCH, 1, KS), jnp.float32) * s      # ConvTranspose1d
    bt = jax.random.normal(ks[11], (1,), jnp.float32) * s
    pt_params = (Wc, bc, W1, b1, We, be, Wd, bd, Wu, bu, Wt, bt)

    x = jax.random.normal(ks[12], (B, 1, L), jnp.float32)              # NCL input

    kparams = make_kernel_params(pt_params)
    out = autoencoder_forward(x, kparams)
    out = jax.block_until_ready(out)

    ref = reference_forward(x, pt_params)
    np.testing.assert_allclose(np.asarray(out), np.asarray(ref),
                               rtol=5e-3, atol=5e-3)
    assert out.shape == (B, 1, L)
    print("KERNEL_OK")
</pallas_src>

<mosaic_0001>
module attributes {stable_mosaic.version = 11 : i64} {
  func.func @autoencoder_kernel(%arg0: i32, %arg1: memref<8x185xf32, #tpu.memory_space<vmem>>, %arg2: memref<185x128xf32, #tpu.memory_space<vmem>>, %arg3: memref<1x128xf32, #tpu.memory_space<vmem>>, %arg4: memref<128x256xf32, #tpu.memory_space<vmem>>, %arg5: memref<1x256xf32, #tpu.memory_space<vmem>>, %arg6: memref<256x128xf32, #tpu.memory_space<vmem>>, %arg7: memref<1x128xf32, #tpu.memory_space<vmem>>, %arg8: memref<128x256xf32, #tpu.memory_space<vmem>>, %arg9: memref<1x256xf32, #tpu.memory_space<vmem>>, %arg10: memref<256x128xf32, #tpu.memory_space<vmem>>, %arg11: memref<1x128xf32, #tpu.memory_space<vmem>>, %arg12: memref<128x256xf32, #tpu.memory_space<vmem>>, %arg13: memref<1x256xf32, #tpu.memory_space<vmem>>, %arg14: memref<8x256xf32, #tpu.memory_space<vmem>>) attributes {dimension_semantics = [#tpu.dimension_semantics<parallel>], iteration_bounds = array<i64: 1>, scalar_prefetch = 0 : i64, scratch_operands = 0 : i64, tpu.core_type = #tpu.core_type<tc>, window_params = [{transform_indices = @transform_0, window_bounds = array<i64: 8, 185>}, {pipeline_mode = #tpu.pipeline_mode<synchronous>, transform_indices = @transform_1, window_bounds = array<i64: 185, 128>}, {pipeline_mode = #tpu.pipeline_mode<synchronous>, transform_indices = @transform_2, window_bounds = array<i64: 1, 128>}, {pipeline_mode = #tpu.pipeline_mode<synchronous>, transform_indices = @transform_3, window_bounds = array<i64: 128, 256>}, {pipeline_mode = #tpu.pipeline_mode<synchronous>, transform_indices = @transform_4, window_bounds = array<i64: 1, 256>}, {pipeline_mode = #tpu.pipeline_mode<synchronous>, transform_indices = @transform_5, window_bounds = array<i64: 256, 128>}, {pipeline_mode = #tpu.pipeline_mode<synchronous>, transform_indices = @transform_6, window_bounds = array<i64: 1, 128>}, {pipeline_mode = #tpu.pipeline_mode<synchronous>, transform_indices = @transform_7, window_bounds = array<i64: 128, 256>}, {pipeline_mode = #tpu.pipeline_mode<synchronous>, transform_indices = @transform_8, window_bounds = array<i64: 1, 256>}, {pipeline_mode = #tpu.pipeline_mode<synchronous>, transform_indices = @transform_9, window_bounds = array<i64: 256, 128>}, {pipeline_mode = #tpu.pipeline_mode<synchronous>, transform_indices = @transform_10, window_bounds = array<i64: 1, 128>}, {pipeline_mode = #tpu.pipeline_mode<synchronous>, transform_indices = @transform_11, window_bounds = array<i64: 128, 256>}, {pipeline_mode = #tpu.pipeline_mode<synchronous>, transform_indices = @transform_12, window_bounds = array<i64: 1, 256>}, {transform_indices = @transform_13, window_bounds = array<i64: 8, 256>}]} {
    %c0 = arith.constant 0 : index
    %c0_0 = arith.constant 0 : index
    %0 = vector.load %arg1[%c0, %c0_0] : memref<8x185xf32, #tpu.memory_space<vmem>>, vector<8x185xf32>
    %c0_1 = arith.constant 0 : index
    %c0_2 = arith.constant 0 : index
    %1 = vector.load %arg2[%c0_1, %c0_2] : memref<185x128xf32, #tpu.memory_space<vmem>>, vector<185x128xf32>
    %cst = arith.constant dense<0.000000e+00> : vector<8x128xf32>
    %2 = tpu.matmul %0, %1, %cst {dimension_numbers = #tpu.dot_dimension_numbers<[1], [0], [0], [1], [0, 0, 1, 1], [], []>} : vector<8x185xf32>, vector<185x128xf32>, vector<8x128xf32> -> vector<8x128xf32>
    %c0_3 = arith.constant 0 : index
    %c0_4 = arith.constant 0 : index
    %3 = vector.load %arg3[%c0_3, %c0_4] : memref<1x128xf32, #tpu.memory_space<vmem>>, vector<1x128xf32>
    %4 = vector.broadcast %3 : vector<1x128xf32> to vector<8x128xf32>
    %5 = arith.addf %2, %4 : vector<8x128xf32>
    %cst_5 = arith.constant 0.000000e+00 : f32
    %6 = vector.broadcast %cst_5 : f32 to vector<8x128xf32>
    %7 = arith.maximumf %5, %6 : vector<8x128xf32>
    %c0_6 = arith.constant 0 : index
    %c0_7 = arith.constant 0 : index
    %8 = vector.load %arg4[%c0_6, %c0_7] : memref<128x256xf32, #tpu.memory_space<vmem>>, vector<128x256xf32>
    %cst_8 = arith.constant dense<0.000000e+00> : vector<8x256xf32>
    %9 = tpu.matmul %7, %8, %cst_8 {dimension_numbers = #tpu.dot_dimension_numbers<[1], [0], [0], [1], [0, 0, 1, 1], [], []>} : vector<8x128xf32>, vector<128x256xf32>, vector<8x256xf32> -> vector<8x256xf32>
    %c0_9 = arith.constant 0 : index
    %c0_10 = arith.constant 0 : index
    %10 = vector.load %arg5[%c0_9, %c0_10] : memref<1x256xf32, #tpu.memory_space<vmem>>, vector<1x256xf32>
    %11 = vector.broadcast %10 : vector<1x256xf32> to vector<8x256xf32>
    %12 = arith.addf %9, %11 : vector<8x256xf32>
    %cst_11 = arith.constant 0.000000e+00 : f32
    %13 = vector.broadcast %cst_11 : f32 to vector<8x256xf32>
    %14 = arith.maximumf %12, %13 : vector<8x256xf32>
    %c0_12 = arith.constant 0 : index
    %c0_13 = arith.constant 0 : index
    %15 = vector.load %arg6[%c0_12, %c0_13] : memref<256x128xf32, #tpu.memory_space<vmem>>, vector<256x128xf32>
    %cst_14 = arith.constant dense<0.000000e+00> : vector<8x128xf32>
    %16 = tpu.matmul %14, %15, %cst_14 {dimension_numbers = #tpu.dot_dimension_numbers<[1], [0], [0], [1], [0, 0, 1, 1], [], []>} : vector<8x256xf32>, vector<256x128xf32>, vector<8x128xf32> -> vector<8x128xf32>
    %c0_15 = arith.constant 0 : index
    %c0_16 = arith.constant 0 : index
    %17 = vector.load %arg7[%c0_15, %c0_16] : memref<1x128xf32, #tpu.memory_space<vmem>>, vector<1x128xf32>
    %18 = vector.broadcast %17 : vector<1x128xf32> to vector<8x128xf32>
    %19 = arith.addf %16, %18 : vector<8x128xf32>
    %cst_17 = arith.constant 0.000000e+00 : f32
    %20 = vector.broadcast %cst_17 : f32 to vector<8x128xf32>
    %21 = arith.maximumf %19, %20 : vector<8x128xf32>
    %c0_18 = arith.constant 0 : index
    %c0_19 = arith.constant 0 : index
    %22 = vector.load %arg8[%c0_18, %c0_19] : memref<128x256xf32, #tpu.memory_space<vmem>>, vector<128x256xf32>
    %cst_20 = arith.constant dense<0.000000e+00> : vector<8x256xf32>
    %23 = tpu.matmul %21, %22, %cst_20 {dimension_numbers = #tpu.dot_dimension_numbers<[1], [0], [0], [1], [0, 0, 1, 1], [], []>} : vector<8x128xf32>, vector<128x256xf32>, vector<8x256xf32> -> vector<8x256xf32>
    %c0_21 = arith.constant 0 : index
    %c0_22 = arith.constant 0 : index
    %24 = vector.load %arg9[%c0_21, %c0_22] : memref<1x256xf32, #tpu.memory_space<vmem>>, vector<1x256xf32>
    %25 = vector.broadcast %24 : vector<1x256xf32> to vector<8x256xf32>
    %26 = arith.addf %23, %25 : vector<8x256xf32>
    %cst_23 = arith.constant 0.000000e+00 : f32
    %27 = vector.broadcast %cst_23 : f32 to vector<8x256xf32>
    %28 = arith.maximumf %26, %27 : vector<8x256xf32>
    %c0_24 = arith.constant 0 : index
    %c0_25 = arith.constant 0 : index
    %29 = vector.load %arg10[%c0_24, %c0_25] : memref<256x128xf32, #tpu.memory_space<vmem>>, vector<256x128xf32>
    %cst_26 = arith.constant dense<0.000000e+00> : vector<8x128xf32>
    %30 = tpu.matmul %28, %29, %cst_26 {dimension_numbers = #tpu.dot_dimension_numbers<[1], [0], [0], [1], [0, 0, 1, 1], [], []>} : vector<8x256xf32>, vector<256x128xf32>, vector<8x128xf32> -> vector<8x128xf32>
    %c0_27 = arith.constant 0 : index
    %c0_28 = arith.constant 0 : index
    %31 = vector.load %arg11[%c0_27, %c0_28] : memref<1x128xf32, #tpu.memory_space<vmem>>, vector<1x128xf32>
    %32 = vector.broadcast %31 : vector<1x128xf32> to vector<8x128xf32>
    %33 = arith.addf %30, %32 : vector<8x128xf32>
    %cst_29 = arith.constant 0.000000e+00 : f32
    %34 = vector.broadcast %cst_29 : f32 to vector<8x128xf32>
    %35 = arith.maximumf %33, %34 : vector<8x128xf32>
    %c0_30 = arith.constant 0 : index
    %c0_31 = arith.constant 0 : index
    %36 = vector.load %arg12[%c0_30, %c0_31] : memref<128x256xf32, #tpu.memory_space<vmem>>, vector<128x256xf32>
    %cst_32 = arith.constant dense<0.000000e+00> : vector<8x256xf32>
    %37 = tpu.matmul %35, %36, %cst_32 {dimension_numbers = #tpu.dot_dimension_numbers<[1], [0], [0], [1], [0, 0, 1, 1], [], []>} : vector<8x128xf32>, vector<128x256xf32>, vector<8x256xf32> -> vector<8x256xf32>
    %c0_33 = arith.constant 0 : index
    %c0_34 = arith.constant 0 : index
    %38 = vector.load %arg13[%c0_33, %c0_34] : memref<1x256xf32, #tpu.memory_space<vmem>>, vector<1x256xf32>
    %39 = vector.broadcast %38 : vector<1x256xf32> to vector<8x256xf32>
    %40 = arith.addf %37, %39 : vector<8x256xf32>
    %41 = arith.negf %40 : vector<8x256xf32>
    %42 = math.exp %41 : vector<8x256xf32>
    %cst_35 = arith.constant 1.000000e+00 : f32
    %43 = vector.broadcast %cst_35 : f32 to vector<8x256xf32>
    %44 = arith.addf %43, %42 : vector<8x256xf32>
    %45 = arith.divf %43, %44 : vector<8x256xf32>
    %c0_36 = arith.constant 0 : index
    %c0_37 = arith.constant 0 : index
    %46 = vector.load %arg14[%c0_36, %c0_37] : memref<8x256xf32, #tpu.memory_space<vmem>>, vector<8x256xf32>
    tpu.vector_store %arg14[%c0_36, %c0_37], %45 {strides = array<i32>} : memref<8x256xf32, #tpu.memory_space<vmem>>, vector<8x256xf32>,
    return
  }
  func.func @transform_0(%arg0: i32) -> (i32, i32) {
    %c0_i32 = arith.constant 0 : i32
    %c0_i32_0 = arith.constant 0 : i32
    return %arg0, %c0_i32 : i32, i32
  }
  func.func @transform_1(%arg0: i32) -> (i32, i32) {
    %c0_i32 = arith.constant 0 : i32
    %c0_i32_0 = arith.constant 0 : i32
    %c0_i32_1 = arith.constant 0 : i32
    return %c0_i32, %c0_i32_0 : i32, i32
  }
  func.func @transform_2(%arg0: i32) -> (i32, i32) {
    %c0_i32 = arith.constant 0 : i32
    %c0_i32_0 = arith.constant 0 : i32
    %c0_i32_1 = arith.constant 0 : i32
    return %c0_i32, %c0_i32_0 : i32, i32
  }
  func.func @transform_3(%arg0: i32) -> (i32, i32) {
    %c0_i32 = arith.constant 0 : i32
    %c0_i32_0 = arith.constant 0 : i32
    %c0_i32_1 = arith.constant 0 : i32
    return %c0_i32, %c0_i32_0 : i32, i32
  }
  func.func @transform_4(%arg0: i32) -> (i32, i32) {
    %c0_i32 = arith.constant 0 : i32
    %c0_i32_0 = arith.constant 0 : i32
    %c0_i32_1 = arith.constant 0 : i32
    return %c0_i32, %c0_i32_0 : i32, i32
  }
  func.func @transform_5(%arg0: i32) -> (i32, i32) {
    %c0_i32 = arith.constant 0 : i32
    %c0_i32_0 = arith.constant 0 : i32
    %c0_i32_1 = arith.constant 0 : i32
    return %c0_i32, %c0_i32_0 : i32, i32
  }
  func.func @transform_6(%arg0: i32) -> (i32, i32) {
    %c0_i32 = arith.constant 0 : i32
    %c0_i32_0 = arith.constant 0 : i32
    %c0_i32_1 = arith.constant 0 : i32
    return %c0_i32, %c0_i32_0 : i32, i32
  }
  func.func @transform_7(%arg0: i32) -> (i32, i32) {
    %c0_i32 = arith.constant 0 : i32
    %c0_i32_0 = arith.constant 0 : i32
    %c0_i32_1 = arith.constant 0 : i32
    return %c0_i32, %c0_i32_0 : i32, i32
  }
  func.func @transform_8(%arg0: i32) -> (i32, i32) {
    %c0_i32 = arith.constant 0 : i32
    %c0_i32_0 = arith.constant 0 : i32
    %c0_i32_1 = arith.constant 0 : i32
    return %c0_i32, %c0_i32_0 : i32, i32
  }
  func.func @transform_9(%arg0: i32) -> (i32, i32) {
    %c0_i32 = arith.constant 0 : i32
    %c0_i32_0 = arith.constant 0 : i32
    %c0_i32_1 = arith.constant 0 : i32
    return %c0_i32, %c0_i32_0 : i32, i32
  }
  func.func @transform_10(%arg0: i32) -> (i32, i32) {
    %c0_i32 = arith.constant 0 : i32
    %c0_i32_0 = arith.constant 0 : i32
    %c0_i32_1 = arith.constant 0 : i32
    return %c0_i32, %c0_i32_0 : i32, i32
  }
  func.func @transform_11(%arg0: i32) -> (i32, i32) {
    %c0_i32 = arith.constant 0 : i32
    %c0_i32_0 = arith.constant 0 : i32
    %c0_i32_1 = arith.constant 0 : i32
    return %c0_i32, %c0_i32_0 : i32, i32
  }
  func.func @transform_12(%arg0: i32) -> (i32, i32) {
    %c0_i32 = arith.constant 0 : i32
    %c0_i32_0 = arith.constant 0 : i32
    %c0_i32_1 = arith.constant 0 : i32
    return %c0_i32, %c0_i32_0 : i32, i32
  }
  func.func @transform_13(%arg0: i32) -> (i32, i32) {
    %c0_i32 = arith.constant 0 : i32
    %c0_i32_0 = arith.constant 0 : i32
    return %arg0, %c0_i32 : i32, i32
  }
}

</mosaic_0001>

<llo_original>
// kernel: autoencoder_forward.1
$region0: #{autoencoder_forward.1}
  #allocation0 [shape = 'u32[]', space=smem, size = 0x4, offset = 0x4, fixed_abs, tag = 'smem constant byte address 0x4 - core index']
  #allocation1 [shape = 'u32[144,128]{1,0:T(1,128)}', space=vmem, size = 0x12000, scoped, tag = 'internal scratch']
  %s0 = inlined_call_operand.vmem [shape: f32[8,185], index: 0, kind: input, shape index: {}]
  %s1 = inlined_call_operand.hbm [shape: f32[185,128], index: 1, kind: input, shape index: {}]
  %s2 = inlined_call_operand.vmem [shape: f32[1,128], index: 2, kind: input, shape index: {}]
  %s3 = inlined_call_operand.hbm [shape: f32[128,256], index: 3, kind: input, shape index: {}]
  %s4 = inlined_call_operand.vmem [shape: f32[1,256], index: 4, kind: input, shape index: {}]
  %s5 = inlined_call_operand.hbm [shape: f32[256,128], index: 5, kind: input, shape index: {}]
  %s6 = inlined_call_operand.vmem [shape: f32[1,128], index: 6, kind: input, shape index: {}]
  %s7 = inlined_call_operand.hbm [shape: f32[128,256], index: 7, kind: input, shape index: {}]
  %s8 = inlined_call_operand.vmem [shape: f32[1,256], index: 8, kind: input, shape index: {}]
  %s9 = inlined_call_operand.hbm [shape: f32[256,128], index: 9, kind: input, shape index: {}]
  %s10 = inlined_call_operand.vmem [shape: f32[1,128], index: 10, kind: input, shape index: {}]
  %s11 = inlined_call_operand.hbm [shape: f32[128,256], index: 11, kind: input, shape index: {}]
  %s12 = inlined_call_operand.vmem [shape: f32[1,256], index: 12, kind: input, shape index: {}]
  %s13 = inlined_call_operand.vmem [shape: f32[8,256], index: 13, kind: output, shape index: {}]
  %s14 = sld [smem:[#allocation0]]
  $region86: #{autoencoder_forward.1} parent=0
    _
  %s16 = ssub.s32 1, %s14
  %s17 = scalar_select 0, %s16, %s14
  $region1: #{autoencoder_forward.1} parent=0
    #allocation2 [shape = 'u8[98304]{0}', space=vmem, size = 0x18000, scoped, tag = 'input window, operand 1, single buffered']
    #allocation3 [shape = 's32[1]{0}', space=sflag, size = 0x4, scoped, tag = 'scoped memory for autoencoder_forward.1']
    #allocation4 [shape = 'u8[131072]{0}', space=vmem, size = 0x20000, scoped, tag = 'input window, operand 3, single buffered']
    #allocation5 [shape = 's32[1]{0}', space=sflag, size = 0x4, scoped, tag = 'scoped memory for autoencoder_forward.1']
    #allocation6 [shape = 'u8[131072]{0}', space=vmem, size = 0x20000, scoped, tag = 'input window, operand 5, single buffered']
    #allocation7 [shape = 'u8[131072]{0}', space=vmem, size = 0x20000, scoped, tag = 'input window, operand 7, single buffered']
    #allocation8 [shape = 's32[1]{0}', space=sflag, size = 0x4, scoped, tag = 'scoped memory for autoencoder_forward.1']
    #allocation9 [shape = 'u8[131072]{0}', space=vmem, size = 0x20000, scoped, tag = 'input window, operand 9, single buffered']
    #allocation10 [shape = 'u8[131072]{0}', space=vmem, size = 0x20000, scoped, tag = 'input window, operand 11, single buffered']
    #allocation11 [shape = 's32[1]{0}', space=sflag, size = 0x4, scoped, tag = 'scoped memory for autoencoder_forward.1']
    %18 = vsyncpa [#allocation3], 0
    %19 = vsyncpa [#allocation5], 0
    %20 = vsyncpa [#allocation8], 0
    %21 = vsyncpa [#allocation11], 0
    // Predicated region
    $region2: #{autoencoder_forward.1} parent=1 // pred_check
      _
    $region3: #{autoencoder_forward.1} parent=1 // pred_check_branch
      %23 = sbr.rel (0) target = $region5
    $region4: #{autoencoder_forward.1} parent=1 // pred_region
      _
    $region5: #{autoencoder_forward.1} parent=1 // pred_fallthru
      _
    // Predicated region
    $region6: #{autoencoder_forward.1} parent=1 // pred_check
      _
    $region7: #{autoencoder_forward.1} parent=1 // pred_check_branch
      %25 = sbr.rel (0) target = $region9
    $region8: #{autoencoder_forward.1} parent=1 // pred_region
      %s27 = ssub.s32 3072, 3072
      %28 = vsyncadd [#allocation3], %s27
      %s29 = sshll.u32 [#allocation2], 4
      %s30 = int_to_ptr.vmem [resolvable:$true] %s29
      %35 = dma.hbm_to_vmem [thread:$0]  %s1, 3072, %s30, [#allocation3], 128, 128, 8
    $region9: #{autoencoder_forward.1} parent=1 // pred_fallthru
      _
    // Predicated region
    $region10: #{autoencoder_forward.1} parent=1 // pred_check
      _
    $region11: #{autoencoder_forward.1} parent=1 // pred_check_branch
      %37 = sbr.rel (0) target = $region13
    $region12: #{autoencoder_forward.1} parent=1 // pred_region
      _
    $region13: #{autoencoder_forward.1} parent=1 // pred_fallthru
      _
    // Predicated region
    $region14: #{autoencoder_forward.1} parent=1 // pred_check
      _
    $region15: #{autoencoder_forward.1} parent=1 // pred_check_branch
      %39 = sbr.rel (0) target = $region17
    $region16: #{autoencoder_forward.1} parent=1 // pred_region
      %s41 = ssub.s32 4096, 4096
      %42 = vsyncadd [#allocation5], %s41
      %s43 = sshll.u32 [#allocation4], 4
      %s44 = int_to_ptr.vmem [resolvable:$true] %s43
      %49 = dma.hbm_to_vmem [thread:$0]  %s3, 4096, %s44, [#allocation5], 256, 256, 16
    $region17: #{autoencoder_forward.1} parent=1 // pred_fallthru
      _
    // Predicated region
    $region18: #{autoencoder_forward.1} parent=1 // pred_check
      _
    $region19: #{autoencoder_forward.1} parent=1 // pred_check_branch
      %51 = sbr.rel (0) target = $region21
    $region20: #{autoencoder_forward.1} parent=1 // pred_region
      _
    $region21: #{autoencoder_forward.1} parent=1 // pred_fallthru
      _
    // Predicated region
    $region22: #{autoencoder_forward.1} parent=1 // pred_check
      _
    $region23: #{autoencoder_forward.1} parent=1 // pred_check_branch
      %53 = sbr.rel (0) target = $region25
    $region24: #{autoencoder_forward.1} parent=1 // pred_region
      %s55 = ssub.s32 4096, 4096
      %56 = vsyncadd [#allocation5], %s55
      %s57 = sshll.u32 [#allocation6], 4
      %s58 = int_to_ptr.vmem [resolvable:$true] %s57
      %63 = dma.hbm_to_vmem [thread:$0]  %s5, 4096, %s58, [#allocation5], 128, 128, 8
    $region25: #{autoencoder_forward.1} parent=1 // pred_fallthru
      _
    // Predicated region
    $region26: #{autoencoder_forward.1} parent=1 // pred_check
      _
    $region27: #{autoencoder_forward.1} parent=1 // pred_check_branch
      %65 = sbr.rel (0) target = $region29
    $region28: #{autoencoder_forward.1} parent=1 // pred_region
      _
    $region29: #{autoencoder_forward.1} parent=1 // pred_fallthru
      _
    // Predicated region
    $region30: #{autoencoder_forward.1} parent=1 // pred_check
      _
    $region31: #{autoencoder_forward.1} parent=1 // pred_check_branch
      %67 = sbr.rel (0) target = $region33
    $region32: #{autoencoder_forward.1} parent=1 // pred_region
      %s69 = ssub.s32 4096, 4096
      %70 = vsyncadd [#allocation8], %s69
      %s71 = sshll.u32 [#allocation7], 4
      %s72 = int_to_ptr.vmem [resolvable:$true] %s71
      %77 = dma.hbm_to_vmem [thread:$0]  %s7, 4096, %s72, [#allocation8], 256, 256, 16
    $region33: #{autoencoder_forward.1} parent=1 // pred_fallthru
      _
    // Predicated region
    $region34: #{autoencoder_forward.1} parent=1 // pred_check
      _
    $region35: #{autoencoder_forward.1} parent=1 // pred_check_branch
      %79 = sbr.rel (0) target = $region37
    $region36: #{autoencoder_forward.1} parent=1 // pred_region
      _
    $region37: #{autoencoder_forward.1} parent=1 // pred_fallthru
      _
    // Predicated region
    $region38: #{autoencoder_forward.1} parent=1 // pred_check
      _
    $region39: #{autoencoder_forward.1} parent=1 // pred_check_branch
      %81 = sbr.rel (0) target = $region41
    $region40: #{autoencoder_forward.1} parent=1 // pred_region
      %s83 = ssub.s32 4096, 4096
      %84 = vsyncadd [#allocation8], %s83
      %s85 = sshll.u32 [#allocation9], 4
      %s86 = int_to_ptr.vmem [resolvable:$true] %s85
      %91 = dma.hbm_to_vmem [thread:$0]  %s9, 4096, %s86, [#allocation8], 128, 128, 8
    $region41: #{autoencoder_forward.1} parent=1 // pred_fallthru
      _
    // Predicated region
    $region42: #{autoencoder_forward.1} parent=1 // pred_check
      _
    $region43: #{autoencoder_forward.1} parent=1 // pred_check_branch
      %93 = sbr.rel (0) target = $region45
    $region44: #{autoencoder_forward.1} parent=1 // pred_region
      _
    $region45: #{autoencoder_forward.1} parent=1 // pred_fallthru
      _
    // Predicated region
    $region46: #{autoencoder_forward.1} parent=1 // pred_check
      _
    $region47: #{autoencoder_forward.1} parent=1 // pred_check_branch
      %95 = sbr.rel (0) target = $region49
    $region48: #{autoencoder_forward.1} parent=1 // pred_region
      %s97 = ssub.s32 4096, 4096
      %98 = vsyncadd [#allocation11], %s97
      %s99 = sshll.u32 [#allocation10], 4
      %s100 = int_to_ptr.vmem [resolvable:$true] %s99
      %105 = dma.hbm_to_vmem [thread:$0]  %s11, 4096, %s100, [#allocation11], 256, 256, 16
    $region49: #{autoencoder_forward.1} parent=1 // pred_fallthru
      _
    // Predicated region
    $region50: #{autoencoder_forward.1} parent=1 // pred_check
      _
    $region51: #{autoencoder_forward.1} parent=1 // pred_check_branch
      %107 = sbr.rel (0) target = $region53
    $region52: #{autoencoder_forward.1} parent=1 // pred_region
      _
    $region53: #{autoencoder_forward.1} parent=1 // pred_fallthru
      _
    // Predicated region
    $region54: #{autoencoder_forward.1} parent=1 // pred_check
      _
    $region55: #{autoencoder_forward.1} parent=1 // pred_check_branch
      %109 = sbr.rel (0) target = $region57
    $region56: #{autoencoder_forward.1} parent=1 // pred_region
      %110 = dma.done [#allocation3], 3072
    $region57: #{autoencoder_forward.1} parent=1 // pred_fallthru
      _
    // Predicated region
    $region58: #{autoencoder_forward.1} parent=1 // pred_check
      _
    $region59: #{autoencoder_forward.1} parent=1 // pred_check_branch
      %112 = sbr.rel (0) target = $region61
    $region60: #{autoencoder_forward.1} parent=1 // pred_region
      %113 = dma.done [#allocation5], 4096
    $region61: #{autoencoder_forward.1} parent=1 // pred_fallthru
      _
    // Predicated region
    $region62: #{autoencoder_forward.1} parent=1 // pred_check
      _
    $region63: #{autoencoder_forward.1} parent=1 // pred_check_branch
      %115 = sbr.rel (0) target = $region65
    $region64: #{autoencoder_forward.1} parent=1 // pred_region
      %116 = dma.done [#allocation5], 4096
    $region65: #{autoencoder_forward.1} parent=1 // pred_fallthru
      _
    // Predicated region
    $region66: #{autoencoder_forward.1} parent=1 // pred_check
      _
    $region67: #{autoencoder_forward.1} parent=1 // pred_check_branch
      %118 = sbr.rel (0) target = $region69
    $region68: #{autoencoder_forward.1} parent=1 // pred_region
      %119 = dma.done [#allocation8], 4096
    $region69: #{autoencoder_forward.1} parent=1 // pred_fallthru
      _
    // Predicated region
    $region70: #{autoencoder_forward.1} parent=1 // pred_check
      _
    $region71: #{autoencoder_forward.1} parent=1 // pred_check_branch
      %121 = sbr.rel (0) target = $region73
    $region72: #{autoencoder_forward.1} parent=1 // pred_region
      %122 = dma.done [#allocation8], 4096
    $region73: #{autoencoder_forward.1} parent=1 // pred_fallthru
      _
    // Predicated region
    $region74: #{autoencoder_forward.1} parent=1 // pred_check
      _
    $region75: #{autoencoder_forward.1} parent=1 // pred_check_branch
      %124 = sbr.rel (0) target = $region77
    $region76: #{autoencoder_forward.1} parent=1 // pred_region
      %125 = dma.done [#allocation11], 4096
    $region77: #{autoencoder_forward.1} parent=1 // pred_fallthru
      _
    %v126 = vld [vmem:[%s0] sm:$0xff]
    %v127 = vld [vmem:[%s0 + $0x8] sm:$0xff]
    %v128 = vld [vmem:[#allocation2] sm:$0xff]
    %v129 = vld [vmem:[#allocation2 + $0x8] sm:$0xff]
    %v130 = vld [vmem:[#allocation2 + $0x10] sm:$0xff]
    %v131 = vld [vmem:[#allocation2 + $0x18] sm:$0xff]
    %v132 = vld [vmem:[#allocation2 + $0x20] sm:$0xff]
    %v133 = vld [vmem:[#allocation2 + $0x28] sm:$0xff]
    %v134 = vld [vmem:[#allocation2 + $0x30] sm:$0xff]
    %v135 = vld [vmem:[#allocation2 + $0x38] sm:$0xff]
    %v136 = vld [vmem:[#allocation2 + $0x40] sm:$0xff]
    %v137 = vld [vmem:[#allocation2 + $0x48] sm:$0xff]
    %v138 = vld [vmem:[#allocation2 + $0x50] sm:$0xff]
    %v139 = vld [vmem:[#allocation2 + $0x58] sm:$0xff]
    %v140 = vld [vmem:[#allocation2 + $0x60] sm:$0xff]
    %v141 = vld [vmem:[#allocation2 + $0x68] sm:$0xff]
    %v142 = vld [vmem:[#allocation2 + $0x70] sm:$0xff]
    %v143 = vld [vmem:[#allocation2 + $0x78] sm:$0xff]
    %v144 = vld [vmem:[#allocation2 + $0x80] sm:$0xff]
    %v145 = vld [vmem:[#allocation2 + $0x88] sm:$0xff]
    %v146 = vld [vmem:[#allocation2 + $0x90] sm:$0xff]
    %v147 = vld [vmem:[#allocation2 + $0x98] sm:$0xff]
    %v148 = vld [vmem:[#allocation2 + $0xa0] sm:$0xff]
    %v149 = vld [vmem:[#allocation2 + $0xa8] sm:$0xff]
    %v150 = vld [vmem:[#allocation2 + $0xb0] sm:$0xff]
    %v151 = vld [vmem:[#allocation2 + $0xb8] sm:$0x1]
    %v152 = vld [vmem:[%s2] sm:$0x1]
    %v154 = vlaneseq
    %v155 = vshrl.u32 %v154, 7
    %v156 = vsub.s32 0, %v155
    %v157 = vrot.slane %v152, %v156
    %vm159 = vcmask 465920
    %v161 = vsel %vm159, %v127, 0
    %vm163 = vcmask 1040384
    %v165 = vsel %vm163, %v151, 0
    %167 = vmatprep.subr.mxu0 0.0
    %168 = vmatpush1.msra.mxu0 %v143
    %169 = vmatprep.subr.mxu0 0.0
    %170 = vmatpush1.msra.mxu0 %v142
    %171 = vmatprep.subr.mxu0 0.0
    %172 = vmatpush1.msra.mxu0 %v141
    %173 = vmatprep.subr.mxu0 0.0
    %174 = vmatpush1.msra.mxu0 %v140
    %175 = vmatprep.subr.mxu0 0.0
    %176 = vmatpush1.msra.mxu0 %v139
    %177 = vmatprep.subr.mxu0 0.0
    %178 = vmatpush1.msra.mxu0 %v138
    %179 = vmatprep.subr.mxu0 0.0
    %180 = vmatpush1.msra.mxu0 %v137
    %181 = vmatprep.subr.mxu0 0.0
    %182 = vmatpush1.msra.mxu0 %v136
    %183 = vmatprep.subr.mxu0 0.0
    %184 = vmatpush1.msra.mxu0 %v135
    %185 = vmatprep.subr.mxu0 0.0
    %186 = vmatpush1.msra.mxu0 %v134
    %187 = vmatprep.subr.mxu0 0.0
    %188 = vmatpush1.msra.mxu0 %v133
    %189 = vmatprep.subr.mxu0 0.0
    %190 = vmatpush1.msra.mxu0 %v132
    %191 = vmatprep.subr.mxu0 0.0
    %192 = vmatpush1.msra.mxu0 %v131
    %193 = vmatprep.subr.mxu0 0.0
    %194 = vmatpush1.msra.mxu0 %v130
    %195 = vmatprep.subr.mxu0 0.0
    %196 = vmatpush1.msra.mxu0 %v129
    %197 = vmatprep.subr.mxu0 0.0
    %198 = vmatpush1.msra.mxu0 %v128
    %199 = vmatprep.subr.mxu0 0.0
    %200 = vmatpush2.msra.mxu0 0.0
    %201 = vmatprep.subr.mxu0 0.0
    %202 = vmatpush2.msra.mxu0 0.0
    %203 = vmatprep.subr.mxu0 0.0
    %204 = vmatpush2.msra.mxu0 0.0
    %205 = vmatprep.subr.mxu0 0.0
    %206 = vmatpush2.msra.mxu0 0.0
    %207 = vmatprep.subr.mxu0 0.0
    %208 = vmatpush2.msra.mxu0 0.0
    %209 = vmatprep.subr.mxu0 0.0
    %210 = vmatpush2.msra.mxu0 0.0
    %211 = vmatprep.subr.mxu0 0.0
    %212 = vmatpush2.msra.mxu0 0.0
    %213 = vmatprep.subr.mxu0 0.0
    %214 = vmatpush2.msra.mxu0 0.0
    %215 = vmatprep.subr.mxu0 0.0
    %216 = vmatpush2.msra.mxu0 %v165
    %217 = vmatprep.subr.mxu0 0.0
    %218 = vmatpush2.msra.mxu0 %v150
    %219 = vmatprep.subr.mxu0 0.0
    %220 = vmatpush2.msra.mxu0 %v149
    %221 = vmatprep.subr.mxu0 0.0
    %222 = vmatpush2.msra.mxu0 %v148
    %223 = vmatprep.subr.mxu0 0.0
    %224 = vmatpush2.msra.mxu0 %v147
    %225 = vmatprep.subr.mxu0 0.0
    %226 = vmatpush2.msra.mxu0 %v146
    %227 = vmatprep.subr.mxu0 0.0
    %228 = vmatpush2.msra.mxu0 %v145
    %229 = vmatprep.subr.mxu0 0.0
    %230 = vmatpush2.msra.mxu0 %v144
    %231 = vmatprep.mubr.f32.mxu0 %v161
    %232 = vmatmul.mubr.f32.gmra.mxu0 %v126
    %v233 = vpop.f32.mrf.mxu0
    %v234 = vadd.f32 %v157, %v233
    %v235 = vpop.f32.mrf.mxu0
    %236 = vdwg.mxu0
    %v237 = vmax.f32 %v234, 0.0
    %v238 = vld [vmem:[#allocation4] sm:$0xff]
    %v239 = vld [vmem:[#allocation4 + $0x8] sm:$0xff]
    %v240 = vld [vmem:[#allocation4 + $0x10] sm:$0xff]
    %v241 = vld [vmem:[#allocation4 + $0x18] sm:$0xff]
    %v242 = vld [vmem:[#allocation4 + $0x20] sm:$0xff]
    %v243 = vld [vmem:[#allocation4 + $0x28] sm:$0xff]
    %v244 = vld [vmem:[#allocation4 + $0x30] sm:$0xff]
    %v245 = vld [vmem:[#allocation4 + $0x38] sm:$0xff]
    %v246 = vld [vmem:[#allocation4 + $0x40] sm:$0xff]
    %v247 = vld [vmem:[#allocation4 + $0x48] sm:$0xff]
    %v248 = vld [vmem:[#allocation4 + $0x50] sm:$0xff]
    %v249 = vld [vmem:[#allocation4 + $0x58] sm:$0xff]
    %v250 = vld [vmem:[#allocation4 + $0x60] sm:$0xff]
    %v251 = vld [vmem:[#allocation4 + $0x68] sm:$0xff]
    %v252 = vld [vmem:[#allocation4 + $0x70] sm:$0xff]
    %v253 = vld [vmem:[#allocation4 + $0x78] sm:$0xff]
    %v254 = vld [vmem:[#allocation4 + $0x80] sm:$0xff]
    %v255 = vld [vmem:[#allocation4 + $0x88] sm:$0xff]
    %v256 = vld [vmem:[#allocation4 + $0x90] sm:$0xff]
    %v257 = vld [vmem:[#allocation4 + $0x98] sm:$0xff]
    %v258 = vld [vmem:[#allocation4 + $0xa0] sm:$0xff]
    %v259 = vld [vmem:[#allocation4 + $0xa8] sm:$0xff]
    %v260 = vld [vmem:[#allocation4 + $0xb0] sm:$0xff]
    %v261 = vld [vmem:[#allocation4 + $0xb8] sm:$0xff]
    %v262 = vld [vmem:[#allocation4 + $0xc0] sm:$0xff]
    %v263 = vld [vmem:[#allocation4 + $0xc8] sm:$0xff]
    %v264 = vld [vmem:[#allocation4 + $0xd0] sm:$0xff]
    %v265 = vld [vmem:[#allocation4 + $0xd8] sm:$0xff]
    %v266 = vld [vmem:[#allocation4 + $0xe0] sm:$0xff]
    %v267 = vld [vmem:[#allocation4 + $0xe8] sm:$0xff]
    %v268 = vld [vmem:[#allocation4 + $0xf0] sm:$0xff]
    %v269 = vld [vmem:[#allocation4 + $0xf8] sm:$0xff]
    %v270 = vld [vmem:[%s4] sm:$0x3]
    %v272 = vlaneseq
    %v273 = vshrl.u32 %v272, 7
    %v274 = vsub.s32 0, %v273
    %v275 = vrot.slane %v270, %v274
    %v276 = vlaneseq
    %v277 = vshrl.u32 %v276, 7
    %v278 = vsub.s32 1, %v277
    %v279 = vrot.slane %v270, %v278
    %282 = vmatprep.subr.mxu0 %v269
    %283 = vmatpush1.msra.mxu0 %v268
    %284 = vmatprep.subr.mxu0 %v267
    %285 = vmatpush1.msra.mxu0 %v266
    %286 = vmatprep.subr.mxu0 %v265
    %287 = vmatpush1.msra.mxu0 %v264
    %288 = vmatprep.subr.mxu0 %v263
    %289 = vmatpush1.msra.mxu0 %v262
    %290 = vmatprep.subr.mxu0 %v261
    %291 = vmatpush1.msra.mxu0 %v260
    %292 = vmatprep.subr.mxu0 %v259
    %293 = vmatpush1.msra.mxu0 %v258
    %294 = vmatprep.subr.mxu0 %v257
    %295 = vmatpush1.msra.mxu0 %v256
    %296 = vmatprep.subr.mxu0 %v255
    %297 = vmatpush1.msra.mxu0 %v254
    %298 = vmatprep.subr.mxu0 %v253
    %299 = vmatpush1.msra.mxu0 %v252
    %300 = vmatprep.subr.mxu0 %v251
    %301 = vmatpush1.msra.mxu0 %v250
    %302 = vmatprep.subr.mxu0 %v249
    %303 = vmatpush1.msra.mxu0 %v248
    %304 = vmatprep.subr.mxu0 %v247
    %305 = vmatpush1.msra.mxu0 %v246
    %306 = vmatprep.subr.mxu0 %v245
    %307 = vmatpush1.msra.mxu0 %v244
    %308 = vmatprep.subr.mxu0 %v243
    %309 = vmatpush1.msra.mxu0 %v242
    %310 = vmatprep.subr.mxu0 %v241
    %311 = vmatpush1.msra.mxu0 %v240
    %312 = vmatprep.subr.mxu0 %v239
    %313 = vmatpush1.msra.mxu0 %v238
    %314 = vmatprep.subr.mxu0 0.0
    %315 = vmatpush2.msra.mxu0 0.0
    %316 = vmatprep.subr.mxu0 0.0
    %317 = vmatpush2.msra.mxu0 0.0
    %318 = vmatprep.subr.mxu0 0.0
    %319 = vmatpush2.msra.mxu0 0.0
    %320 = vmatprep.subr.mxu0 0.0
    %321 = vmatpush2.msra.mxu0 0.0
    %322 = vmatprep.subr.mxu0 0.0
    %323 = vmatpush2.msra.mxu0 0.0
    %324 = vmatprep.subr.mxu0 0.0
    %325 = vmatpush2.msra.mxu0 0.0
    %326 = vmatprep.subr.mxu0 0.0
    %327 = vmatpush2.msra.mxu0 0.0
    %328 = vmatprep.subr.mxu0 0.0
    %329 = vmatpush2.msra.mxu0 0.0
    %330 = vmatprep.subr.mxu0 0.0
    %331 = vmatpush2.msra.mxu0 0.0
    %332 = vmatprep.subr.mxu0 0.0
    %333 = vmatpush2.msra.mxu0 0.0
    %334 = vmatprep.subr.mxu0 0.0
    %335 = vmatpush2.msra.mxu0 0.0
    %336 = vmatprep.subr.mxu0 0.0
    %337 = vmatpush2.msra.mxu0 0.0
    %338 = vmatprep.subr.mxu0 0.0
    %339 = vmatpush2.msra.mxu0 0.0
    %340 = vmatprep.subr.mxu0 0.0
    %341 = vmatpush2.msra.mxu0 0.0
    %342 = vmatprep.subr.mxu0 0.0
    %343 = vmatpush2.msra.mxu0 0.0
    %344 = vmatprep.subr.mxu0 0.0
    %345 = vmatpush2.msra.mxu0 0.0
    %346 = vmatprep.mubr.f32.mxu0 0.0
    %347 = vmatmul.mubr.f32.gmra.mxu0 %v237
    %v348 = vpop.f32.mrf.mxu0
    %v349 = vadd.f32 %v275, %v348
    %v350 = vpop.f32.mrf.mxu0
    %v351 = vadd.f32 %v279, %v350
    %352 = vdwg.mxu0
    %v353 = vmax.f32 %v349, 0.0
    %v354 = vmax.f32 %v351, 0.0
    %v355 = vld [vmem:[#allocation6] sm:$0xff]
    %v356 = vld [vmem:[#allocation6 + $0x8] sm:$0xff]
    %v357 = vld [vmem:[#allocation6 + $0x10] sm:$0xff]
    %v358 = vld [vmem:[#allocation6 + $0x18] sm:$0xff]
    %v359 = vld [vmem:[#allocation6 + $0x20] sm:$0xff]
    %v360 = vld [vmem:[#allocation6 + $0x28] sm:$0xff]
    %v361 = vld [vmem:[#allocation6 + $0x30] sm:$0xff]
    %v362 = vld [vmem:[#allocation6 + $0x38] sm:$0xff]
    %v363 = vld [vmem:[#allocation6 + $0x40] sm:$0xff]
    %v364 = vld [vmem:[#allocation6 + $0x48] sm:$0xff]
    %v365 = vld [vmem:[#allocation6 + $0x50] sm:$0xff]
    %v366 = vld [vmem:[#allocation6 + $0x58] sm:$0xff]
    %v367 = vld [vmem:[#allocation6 + $0x60] sm:$0xff]
    %v368 = vld [vmem:[#allocation6 + $0x68] sm:$0xff]
    %v369 = vld [vmem:[#allocation6 + $0x70] sm:$0xff]
    %v370 = vld [vmem:[#allocation6 + $0x78] sm:$0xff]
    %v371 = vld [vmem:[#allocation6 + $0x80] sm:$0xff]
    %v372 = vld [vmem:[#allocation6 + $0x88] sm:$0xff]
    %v373 = vld [vmem:[#allocation6 + $0x90] sm:$0xff]
    %v374 = vld [vmem:[#allocation6 + $0x98] sm:$0xff]
    %v375 = vld [vmem:[#allocation6 + $0xa0] sm:$0xff]
    %v376 = vld [vmem:[#allocation6 + $0xa8] sm:$0xff]
    %v377 = vld [vmem:[#allocation6 + $0xb0] sm:$0xff]
    %v378 = vld [vmem:[#allocation6 + $0xb8] sm:$0xff]
    %v379 = vld [vmem:[#allocation6 + $0xc0] sm:$0xff]
    %v380 = vld [vmem:[#allocation6 + $0xc8] sm:$0xff]
    %v381 = vld [vmem:[#allocation6 + $0xd0] sm:$0xff]
    %v382 = vld [vmem:[#allocation6 + $0xd8] sm:$0xff]
    %v383 = vld [vmem:[#allocation6 + $0xe0] sm:$0xff]
    %v384 = vld [vmem:[#allocation6 + $0xe8] sm:$0xff]
    %v385 = vld [vmem:[#allocation6 + $0xf0] sm:$0xff]
    %v386 = vld [vmem:[#allocation6 + $0xf8] sm:$0xff]
    %v387 = vld [vmem:[%s6] sm:$0x1]
    %v389 = vlaneseq
    %v390 = vshrl.u32 %v389, 7
    %v391 = vsub.s32 0, %v390
    %v392 = vrot.slane %v387, %v391
    %394 = vmatprep.subr.mxu0 0.0
    %395 = vmatpush1.msra.mxu0 %v370
    %396 = vmatprep.subr.mxu0 0.0
    %397 = vmatpush1.msra.mxu0 %v369
    %398 = vmatprep.subr.mxu0 0.0
    %399 = vmatpush1.msra.mxu0 %v368
    %400 = vmatprep.subr.mxu0 0.0
    %401 = vmatpush1.msra.mxu0 %v367
    %402 = vmatprep.subr.mxu0 0.0
    %403 = vmatpush1.msra.mxu0 %v366
    %404 = vmatprep.subr.mxu0 0.0
    %405 = vmatpush1.msra.mxu0 %v365
    %406 = vmatprep.subr.mxu0 0.0
    %407 = vmatpush1.msra.mxu0 %v364
    %408 = vmatprep.subr.mxu0 0.0
    %409 = vmatpush1.msra.mxu0 %v363
    %410 = vmatprep.subr.mxu0 0.0
    %411 = vmatpush1.msra.mxu0 %v362
    %412 = vmatprep.subr.mxu0 0.0
    %413 = vmatpush1.msra.mxu0 %v361
    %414 = vmatprep.subr.mxu0 0.0
    %415 = vmatpush1.msra.mxu0 %v360
    %416 = vmatprep.subr.mxu0 0.0
    %417 = vmatpush1.msra.mxu0 %v359
    %418 = vmatprep.subr.mxu0 0.0
    %419 = vmatpush1.msra.mxu0 %v358
    %420 = vmatprep.subr.mxu0 0.0
    %421 = vmatpush1.msra.mxu0 %v357
    %422 = vmatprep.subr.mxu0 0.0
    %423 = vmatpush1.msra.mxu0 %v356
    %424 = vmatprep.subr.mxu0 0.0
    %425 = vmatpush1.msra.mxu0 %v355
    %426 = vmatprep.subr.mxu0 0.0
    %427 = vmatpush2.msra.mxu0 %v386
    %428 = vmatprep.subr.mxu0 0.0
    %429 = vmatpush2.msra.mxu0 %v385
    %430 = vmatprep.subr.mxu0 0.0
    %431 = vmatpush2.msra.mxu0 %v384
    %432 = vmatprep.subr.mxu0 0.0
    %433 = vmatpush2.msra.mxu0 %v383
    %434 = vmatprep.subr.mxu0 0.0
    %435 = vmatpush2.msra.mxu0 %v382
    %436 = vmatprep.subr.mxu0 0.0
    %437 = vmatpush2.msra.mxu0 %v381
    %438 = vmatprep.subr.mxu0 0.0
    %439 = vmatpush2.msra.mxu0 %v380
    %440 = vmatprep.subr.mxu0 0.0
    %441 = vmatpush2.msra.mxu0 %v379
    %442 = vmatprep.subr.mxu0 0.0
    %443 = vmatpush2.msra.mxu0 %v378
    %444 = vmatprep.subr.mxu0 0.0
    %445 = vmatpush2.msra.mxu0 %v377
    %446 = vmatprep.subr.mxu0 0.0
    %447 = vmatpush2.msra.mxu0 %v376
    %448 = vmatprep.subr.mxu0 0.0
    %449 = vmatpush2.msra.mxu0 %v375
    %450 = vmatprep.subr.mxu0 0.0
    %451 = vmatpush2.msra.mxu0 %v374
    %452 = vmatprep.subr.mxu0 0.0
    %453 = vmatpush2.msra.mxu0 %v373
    %454 = vmatprep.subr.mxu0 0.0
    %455 = vmatpush2.msra.mxu0 %v372
    %456 = vmatprep.subr.mxu0 0.0
    %457 = vmatpush2.msra.mxu0 %v371
    %458 = vmatprep.mubr.f32.mxu0 %v354
    %459 = vmatmul.mubr.f32.gmra.mxu0 %v353
    %v460 = vpop.f32.mrf.mxu0
    %v461 = vadd.f32 %v392, %v460
    %v462 = vpop.f32.mrf.mxu0
    %463 = vdwg.mxu0
    %v464 = vmax.f32 %v461, 0.0
    %v465 = vld [vmem:[#allocation7] sm:$0xff]
    %v466 = vld [vmem:[#allocation7 + $0x8] sm:$0xff]
    %v467 = vld [vmem:[#allocation7 + $0x10] sm:$0xff]
    %v468 = vld [vmem:[#allocation7 + $0x18] sm:$0xff]
    %v469 = vld [vmem:[#allocation7 + $0x20] sm:$0xff]
    %v470 = vld [vmem:[#allocation7 + $0x28] sm:$0xff]
    %v471 = vld [vmem:[#allocation7 + $0x30] sm:$0xff]
    %v472 = vld [vmem:[#allocation7 + $0x38] sm:$0xff]
    %v473 = vld [vmem:[#allocation7 + $0x40] sm:$0xff]
    %v474 = vld [vmem:[#allocation7 + $0x48] sm:$0xff]
    %v475 = vld [vmem:[#allocation7 + $0x50] sm:$0xff]
    %v476 = vld [vmem:[#allocation7 + $0x58] sm:$0xff]
    %v477 = vld [vmem:[#allocation7 + $0x60] sm:$0xff]
    %v478 = vld [vmem:[#allocation7 + $0x68] sm:$0xff]
    %v479 = vld [vmem:[#allocation7 + $0x70] sm:$0xff]
    %v480 = vld [vmem:[#allocation7 + $0x78] sm:$0xff]
    %v481 = vld [vmem:[#allocation7 + $0x80] sm:$0xff]
    %v482 = vld [vmem:[#allocation7 + $0x88] sm:$0xff]
    %v483 = vld [vmem:[#allocation7 + $0x90] sm:$0xff]
    %v484 = vld [vmem:[#allocation7 + $0x98] sm:$0xff]
    %v485 = vld [vmem:[#allocation7 + $0xa0] sm:$0xff]
    %v486 = vld [vmem:[#allocation7 + $0xa8] sm:$0xff]
    %v487 = vld [vmem:[#allocation7 + $0xb0] sm:$0xff]
    %v488 = vld [vmem:[#allocation7 + $0xb8] sm:$0xff]
    %v489 = vld [vmem:[#allocation7 + $0xc0] sm:$0xff]
    %v490 = vld [vmem:[#allocation7 + $0xc8] sm:$0xff]
    %v491 = vld [vmem:[#allocation7 + $0xd0] sm:$0xff]
    %v492 = vld [vmem:[#allocation7 + $0xd8] sm:$0xff]
    %v493 = vld [vmem:[#allocation7 + $0xe0] sm:$0xff]
    %v494 = vld [vmem:[#allocation7 + $0xe8] sm:$0xff]
    %v495 = vld [vmem:[#allocation7 + $0xf0] sm:$0xff]
    %v496 = vld [vmem:[#allocation7 + $0xf8] sm:$0xff]
    %v497 = vld [vmem:[%s8] sm:$0x3]
    %v499 = vlaneseq
    %v500 = vshrl.u32 %v499, 7
    %v501 = vsub.s32 0, %v500
    %v502 = vrot.slane %v497, %v501
    %v503 = vlaneseq
    %v504 = vshrl.u32 %v503, 7
    %v505 = vsub.s32 1, %v504
    %v506 = vrot.slane %v497, %v505
    %509 = vmatprep.subr.mxu0 %v496
    %510 = vmatpush1.msra.mxu0 %v495
    %511 = vmatprep.subr.mxu0 %v494
    %512 = vmatpush1.msra.mxu0 %v493
    %513 = vmatprep.subr.mxu0 %v492
    %514 = vmatpush1.msra.mxu0 %v491
    %515 = vmatprep.subr.mxu0 %v490
    %516 = vmatpush1.msra.mxu0 %v489
    %517 = vmatprep.subr.mxu0 %v488
    %518 = vmatpush1.msra.mxu0 %v487
    %519 = vmatprep.subr.mxu0 %v486
    %520 = vmatpush1.msra.mxu0 %v485
    %521 = vmatprep.subr.mxu0 %v484
    %522 = vmatpush1.msra.mxu0 %v483
    %523 = vmatprep.subr.mxu0 %v482
    %524 = vmatpush1.msra.mxu0 %v481
    %525 = vmatprep.subr.mxu0 %v480
    %526 = vmatpush1.msra.mxu0 %v479
    %527 = vmatprep.subr.mxu0 %v478
    %528 = vmatpush1.msra.mxu0 %v477
    %529 = vmatprep.subr.mxu0 %v476
    %530 = vmatpush1.msra.mxu0 %v475
    %531 = vmatprep.subr.mxu0 %v474
    %532 = vmatpush1.msra.mxu0 %v473
    %533 = vmatprep.subr.mxu0 %v472
    %534 = vmatpush1.msra.mxu0 %v471
    %535 = vmatprep.subr.mxu0 %v470
    %536 = vmatpush1.msra.mxu0 %v469
    %537 = vmatprep.subr.mxu0 %v468
    %538 = vmatpush1.msra.mxu0 %v467
    %539 = vmatprep.subr.mxu0 %v466
    %540 = vmatpush1.msra.mxu0 %v465
    %541 = vmatprep.subr.mxu0 0.0
    %542 = vmatpush2.msra.mxu0 0.0
    %543 = vmatprep.subr.mxu0 0.0
    %544 = vmatpush2.msra.mxu0 0.0
    %545 = vmatprep.subr.mxu0 0.0
    %546 = vmatpush2.msra.mxu0 0.0
    %547 = vmatprep.subr.mxu0 0.0
    %548 = vmatpush2.msra.mxu0 0.0
    %549 = vmatprep.subr.mxu0 0.0
    %550 = vmatpush2.msra.mxu0 0.0
    %551 = vmatprep.subr.mxu0 0.0
    %552 = vmatpush2.msra.mxu0 0.0
    %553 = vmatprep.subr.mxu0 0.0
    %554 = vmatpush2.msra.mxu0 0.0
    %555 = vmatprep.subr.mxu0 0.0
    %556 = vmatpush2.msra.mxu0 0.0
    %557 = vmatprep.subr.mxu0 0.0
    %558 = vmatpush2.msra.mxu0 0.0
    %559 = vmatprep.subr.mxu0 0.0
    %560 = vmatpush2.msra.mxu0 0.0
    %561 = vmatprep.subr.mxu0 0.0
    %562 = vmatpush2.msra.mxu0 0.0
    %563 = vmatprep.subr.mxu0 0.0
    %564 = vmatpush2.msra.mxu0 0.0
    %565 = vmatprep.subr.mxu0 0.0
    %566 = vmatpush2.msra.mxu0 0.0
    %567 = vmatprep.subr.mxu0 0.0
    %568 = vmatpush2.msra.mxu0 0.0
    %569 = vmatprep.subr.mxu0 0.0
    %570 = vmatpush2.msra.mxu0 0.0
    %571 = vmatprep.subr.mxu0 0.0
    %572 = vmatpush2.msra.mxu0 0.0
    %573 = vmatprep.mubr.f32.mxu0 0.0
    %574 = vmatmul.mubr.f32.gmra.mxu0 %v464
    %v575 = vpop.f32.mrf.mxu0
    %v576 = vadd.f32 %v502, %v575
    %v577 = vpop.f32.mrf.mxu0
    %v578 = vadd.f32 %v506, %v577
    %579 = vdwg.mxu0
    %v580 = vmax.f32 %v576, 0.0
    %v581 = vmax.f32 %v578, 0.0
    %v582 = vld [vmem:[#allocation9] sm:$0xff]
    %v583 = vld [vmem:[#allocation9 + $0x8] sm:$0xff]
    %v584 = vld [vmem:[#allocation9 + $0x10] sm:$0xff]
    %v585 = vld [vmem:[#allocation9 + $0x18] sm:$0xff]
    %v586 = vld [vmem:[#allocation9 + $0x20] sm:$0xff]
    %v587 = vld [vmem:[#allocation9 + $0x28] sm:$0xff]
    %v588 = vld [vmem:[#allocation9 + $0x30] sm:$0xff]
    %v589 = vld [vmem:[#allocation9 + $0x38] sm:$0xff]
    %v590 = vld [vmem:[#allocation9 + $0x40] sm:$0xff]
    %v591 = vld [vmem:[#allocation9 + $0x48] sm:$0xff]
    %v592 = vld [vmem:[#allocation9 + $0x50] sm:$0xff]
    %v593 = vld [vmem:[#allocation9 + $0x58] sm:$0xff]
    %v594 = vld [vmem:[#allocation9 + $0x60] sm:$0xff]
    %v595 = vld [vmem:[#allocation9 + $0x68] sm:$0xff]
    %v596 = vld [vmem:[#allocation9 + $0x70] sm:$0xff]
    %v597 = vld [vmem:[#allocation9 + $0x78] sm:$0xff]
    %v598 = vld [vmem:[#allocation9 + $0x80] sm:$0xff]
    %v599 = vld [vmem:[#allocation9 + $0x88] sm:$0xff]
    %v600 = vld [vmem:[#allocation9 + $0x90] sm:$0xff]
    %v601 = vld [vmem:[#allocation9 + $0x98] sm:$0xff]
    %v602 = vld [vmem:[#allocation9 + $0xa0] sm:$0xff]
    %v603 = vld [vmem:[#allocation9 + $0xa8] sm:$0xff]
    %v604 = vld [vmem:[#allocation9 + $0xb0] sm:$0xff]
    %v605 = vld [vmem:[#allocation9 + $0xb8] sm:$0xff]
    %v606 = vld [vmem:[#allocation9 + $0xc0] sm:$0xff]
    %v607 = vld [vmem:[#allocation9 + $0xc8] sm:$0xff]
    %v608 = vld [vmem:[#allocation9 + $0xd0] sm:$0xff]
    %v609 = vld [vmem:[#allocation9 + $0xd8] sm:$0xff]
    %v610 = vld [vmem:[#allocation9 + $0xe0] sm:$0xff]
    %v611 = vld [vmem:[#allocation9 + $0xe8] sm:$0xff]
    %v612 = vld [vmem:[#allocation9 + $0xf0] sm:$0xff]
    %v613 = vld [vmem:[#allocation9 + $0xf8] sm:$0xff]
    %v614 = vld [vmem:[%s10] sm:$0x1]
    %v616 = vlaneseq
    %v617 = vshrl.u32 %v616, 7
    %v618 = vsub.s32 0, %v617
    %v619 = vrot.slane %v614, %v618
    %621 = vmatprep.subr.mxu0 0.0
    %622 = vmatpush1.msra.mxu0 %v597
    %623 = vmatprep.subr.mxu0 0.0
    %624 = vmatpush1.msra.mxu0 %v596
    %625 = vmatprep.subr.mxu0 0.0
    %626 = vmatpush1.msra.mxu0 %v595
    %627 = vmatprep.subr.mxu0 0.0
    %628 = vmatpush1.msra.mxu0 %v594
    %629 = vmatprep.subr.mxu0 0.0
    %630 = vmatpush1.msra.mxu0 %v593
    %631 = vmatprep.subr.mxu0 0.0
    %632 = vmatpush1.msra.mxu0 %v592
    %633 = vmatprep.subr.mxu0 0.0
    %634 = vmatpush1.msra.mxu0 %v591
    %635 = vmatprep.subr.mxu0 0.0
    %636 = vmatpush1.msra.mxu0 %v590
    %637 = vmatprep.subr.mxu0 0.0
    %638 = vmatpush1.msra.mxu0 %v589
    %639 = vmatprep.subr.mxu0 0.0
    %640 = vmatpush1.msra.mxu0 %v588
    %641 = vmatprep.subr.mxu0 0.0
    %642 = vmatpush1.msra.mxu0 %v587
    %643 = vmatprep.subr.mxu0 0.0
    %644 = vmatpush1.msra.mxu0 %v586
    %645 = vmatprep.subr.mxu0 0.0
    %646 = vmatpush1.msra.mxu0 %v585
    %647 = vmatprep.subr.mxu0 0.0
    %648 = vmatpush1.msra.mxu0 %v584
    %649 = vmatprep.subr.mxu0 0.0
    %650 = vmatpush1.msra.mxu0 %v583
    %651 = vmatprep.subr.mxu0 0.0
    %652 = vmatpush1.msra.mxu0 %v582
    %653 = vmatprep.subr.mxu0 0.0
    %654 = vmatpush2.msra.mxu0 %v613
    %655 = vmatprep.subr.mxu0 0.0
    %656 = vmatpush2.msra.mxu0 %v612
    %657 = vmatprep.subr.mxu0 0.0
    %658 = vmatpush2.msra.mxu0 %v611
    %659 = vmatprep.subr.mxu0 0.0
    %660 = vmatpush2.msra.mxu0 %v610
    %661 = vmatprep.subr.mxu0 0.0
    %662 = vmatpush2.msra.mxu0 %v609
    %663 = vmatprep.subr.mxu0 0.0
    %664 = vmatpush2.msra.mxu0 %v608
    %665 = vmatprep.subr.mxu0 0.0
    %666 = vmatpush2.msra.mxu0 %v607
    %667 = vmatprep.subr.mxu0 0.0
    %668 = vmatpush2.msra.mxu0 %v606
    %669 = vmatprep.subr.mxu0 0.0
    %670 = vmatpush2.msra.mxu0 %v605
    %671 = vmatprep.subr.mxu0 0.0
    %672 = vmatpush2.msra.mxu0 %v604
    %673 = vmatprep.subr.mxu0 0.0
    %674 = vmatpush2.msra.mxu0 %v603
    %675 = vmatprep.subr.mxu0 0.0
    %676 = vmatpush2.msra.mxu0 %v602
    %677 = vmatprep.subr.mxu0 0.0
    %678 = vmatpush2.msra.mxu0 %v601
    %679 = vmatprep.subr.mxu0 0.0
    %680 = vmatpush2.msra.mxu0 %v600
    %681 = vmatprep.subr.mxu0 0.0
    %682 = vmatpush2.msra.mxu0 %v599
    %683 = vmatprep.subr.mxu0 0.0
    %684 = vmatpush2.msra.mxu0 %v598
    %685 = vmatprep.mubr.f32.mxu0 %v581
    %686 = vmatmul.mubr.f32.gmra.mxu0 %v580
    %v687 = vpop.f32.mrf.mxu0
    %v688 = vadd.f32 %v619, %v687
    %v689 = vpop.f32.mrf.mxu0
    %690 = vdwg.mxu0
    %v691 = vmax.f32 %v688, 0.0
    %v692 = vld [vmem:[#allocation10] sm:$0xff]
    %v693 = vld [vmem:[#allocation10 + $0x8] sm:$0xff]
    %v694 = vld [vmem:[#allocation10 + $0x10] sm:$0xff]
    %v695 = vld [vmem:[#allocation10 + $0x18] sm:$0xff]
    %v696 = vld [vmem:[#allocation10 + $0x20] sm:$0xff]
    %v697 = vld [vmem:[#allocation10 + $0x28] sm:$0xff]
    %v698 = vld [vmem:[#allocation10 + $0x30] sm:$0xff]
    %v699 = vld [vmem:[#allocation10 + $0x38] sm:$0xff]
    %v700 = vld [vmem:[#allocation10 + $0x40] sm:$0xff]
    %v701 = vld [vmem:[#allocation10 + $0x48] sm:$0xff]
    %v702 = vld [vmem:[#allocation10 + $0x50] sm:$0xff]
    %v703 = vld [vmem:[#allocation10 + $0x58] sm:$0xff]
    %v704 = vld [vmem:[#allocation10 + $0x60] sm:$0xff]
    %v705 = vld [vmem:[#allocation10 + $0x68] sm:$0xff]
    %v706 = vld [vmem:[#allocation10 + $0x70] sm:$0xff]
    %v707 = vld [vmem:[#allocation10 + $0x78] sm:$0xff]
    %v708 = vld [vmem:[#allocation10 + $0x80] sm:$0xff]
    %v709 = vld [vmem:[#allocation10 + $0x88] sm:$0xff]
    %v710 = vld [vmem:[#allocation10 + $0x90] sm:$0xff]
    %v711 = vld [vmem:[#allocation10 + $0x98] sm:$0xff]
    %v712 = vld [vmem:[#allocation10 + $0xa0] sm:$0xff]
    %v713 = vld [vmem:[#allocation10 + $0xa8] sm:$0xff]
    %v714 = vld [vmem:[#allocation10 + $0xb0] sm:$0xff]
    %v715 = vld [vmem:[#allocation10 + $0xb8] sm:$0xff]
    %v716 = vld [vmem:[#allocation10 + $0xc0] sm:$0xff]
    %v717 = vld [vmem:[#allocation10 + $0xc8] sm:$0xff]
    %v718 = vld [vmem:[#allocation10 + $0xd0] sm:$0xff]
    %v719 = vld [vmem:[#allocation10 + $0xd8] sm:$0xff]
    %v720 = vld [vmem:[#allocation10 + $0xe0] sm:$0xff]
    %v721 = vld [vmem:[#allocation10 + $0xe8] sm:$0xff]
    %v722 = vld [vmem:[#allocation10 + $0xf0] sm:$0xff]
    %v723 = vld [vmem:[#allocation10 + $0xf8] sm:$0xff]
    %v724 = vld [vmem:[%s12] sm:$0x3]
    %v726 = vlaneseq
    %v727 = vshrl.u32 %v726, 7
    %v728 = vsub.s32 0, %v727
    %v729 = vrot.slane %v724, %v728
    %v730 = vlaneseq
    %v731 = vshrl.u32 %v730, 7
    %v732 = vsub.s32 1, %v731
    %v733 = vrot.slane %v724, %v732
    %736 = vmatprep.subr.mxu0 %v723
    %737 = vmatpush1.msra.mxu0 %v722
    %738 = vmatprep.subr.mxu0 %v721
    %739 = vmatpush1.msra.mxu0 %v720
    %740 = vmatprep.subr.mxu0 %v719
    %741 = vmatpush1.msra.mxu0 %v718
    %742 = vmatprep.subr.mxu0 %v717
    %743 = vmatpush1.msra.mxu0 %v716
    %744 = vmatprep.subr.mxu0 %v715
    %745 = vmatpush1.msra.mxu0 %v714
    %746 = vmatprep.subr.mxu0 %v713
    %747 = vmatpush1.msra.mxu0 %v712
    %748 = vmatprep.subr.mxu0 %v711
    %749 = vmatpush1.msra.mxu0 %v710
    %750 = vmatprep.subr.mxu0 %v709
    %751 = vmatpush1.msra.mxu0 %v708
    %752 = vmatprep.subr.mxu0 %v707
    %753 = vmatpush1.msra.mxu0 %v706
    %754 = vmatprep.subr.mxu0 %v705
    %755 = vmatpush1.msra.mxu0 %v704
    %756 = vmatprep.subr.mxu0 %v703
    %757 = vmatpush1.msra.mxu0 %v702
    %758 = vmatprep.subr.mxu0 %v701
    %759 = vmatpush1.msra.mxu0 %v700
    %760 = vmatprep.subr.mxu0 %v699
    %761 = vmatpush1.msra.mxu0 %v698
    %762 = vmatprep.subr.mxu0 %v697
    %763 = vmatpush1.msra.mxu0 %v696
    %764 = vmatprep.subr.mxu0 %v695
    %765 = vmatpush1.msra.mxu0 %v694
    %766 = vmatprep.subr.mxu0 %v693
    %767 = vmatpush1.msra.mxu0 %v692
    %768 = vmatprep.subr.mxu0 0.0
    %769 = vmatpush2.msra.mxu0 0.0
    %770 = vmatprep.subr.mxu0 0.0
    %771 = vmatpush2.msra.mxu0 0.0
    %772 = vmatprep.subr.mxu0 0.0
    %773 = vmatpush2.msra.mxu0 0.0
    %774 = vmatprep.subr.mxu0 0.0
    %775 = vmatpush2.msra.mxu0 0.0
    %776 = vmatprep.subr.mxu0 0.0
    %777 = vmatpush2.msra.mxu0 0.0
    %778 = vmatprep.subr.mxu0 0.0
    %779 = vmatpush2.msra.mxu0 0.0
    %780 = vmatprep.subr.mxu0 0.0
    %781 = vmatpush2.msra.mxu0 0.0
    %782 = vmatprep.subr.mxu0 0.0
    %783 = vmatpush2.msra.mxu0 0.0
    %784 = vmatprep.subr.mxu0 0.0
    %785 = vmatpush2.msra.mxu0 0.0
    %786 = vmatprep.subr.mxu0 0.0
    %787 = vmatpush2.msra.mxu0 0.0
    %788 = vmatprep.subr.mxu0 0.0
    %789 = vmatpush2.msra.mxu0 0.0
    %790 = vmatprep.subr.mxu0 0.0
    %791 = vmatpush2.msra.mxu0 0.0
    %792 = vmatprep.subr.mxu0 0.0
    %793 = vmatpush2.msra.mxu0 0.0
    %794 = vmatprep.subr.mxu0 0.0
    %795 = vmatpush2.msra.mxu0 0.0
    %796 = vmatprep.subr.mxu0 0.0
    %797 = vmatpush2.msra.mxu0 0.0
    %798 = vmatprep.subr.mxu0 0.0
    %799 = vmatpush2.msra.mxu0 0.0
    %800 = vmatprep.mubr.f32.mxu0 0.0
    %801 = vmatmul.mubr.f32.gmra.mxu0 %v691
    %v802 = vpop.f32.mrf.mxu0
    %v803 = vadd.f32 %v729, %v802
    %v804 = vpop.f32.mrf.mxu0
    %v805 = vadd.f32 %v733, %v804
    %806 = vdwg.mxu0
    %v807 = vxor.u32 %v803, 2147483648
    %v808 = vxor.u32 %v805, 2147483648
    %v809 = vmul.f32 %v807, 1.442695
    %v810 = vpow.pop %v809
    %v811 = vmul.f32 %v808, 1.442695
    %v812 = vpow.pop %v811
    %v813 = vadd.f32 %v810, 1.0
    %v814 = vadd.f32 %v812, 1.0
    %v815 = vrcp.pop %v813
    %v816 = vmul.f32 1.0, %v815
    %v817 = vrcp.pop %v814
    %v818 = vmul.f32 1.0, %v817
    %819 = vst [vmem:[%s13] sm:$0xff] %v816
    %820 = vst [vmem:[%s13 + $0x8] sm:$0xff] %v818
    // Predicated region
    $region78: #{autoencoder_forward.1} parent=1 // pred_check
      _
    $region79: #{autoencoder_forward.1} parent=1 // pred_check_branch
      %822 = sbr.rel (0) target = $region81
    $region80: #{autoencoder_forward.1} parent=1 // pred_region
      _
    $region81: #{autoencoder_forward.1} parent=1 // pred_fallthru
      _
    // Predicated region
    $region82: #{autoencoder_forward.1} parent=1 // pred_check
      _
    $region83: #{autoencoder_forward.1} parent=1 // pred_check_branch
      %824 = sbr.rel (0) target = $region85
    $region84: #{autoencoder_forward.1} parent=1 // pred_region
      _
    $region85: #{autoencoder_forward.1} parent=1 // pred_fallthru
      _
    %825 = vsyncpa [#allocation3], 1
    %826 = vsyncpa [#allocation5], 1
    %827 = vsyncpa [#allocation8], 1
    %828 = vsyncpa [#allocation11], 1

</llo_original>
